<compile_context>
chip_gen: v5e
topology: v5e:2x2
jax: 0.10.0
libtpu: 0.0.40
codegen_flags: <defaults>
</compile_context>

<pallas_src>
import jax
import jax.numpy as jnp
from jax.experimental import pallas as pl
from jax.experimental.pallas import tpu as pltpu

EPS = 1e-5


def _vmem_budgets():
    """(tile VMEM budget bytes, scoped vmem_limit_bytes), generation-aware."""
    cap = None
    try:
        cap = pltpu.get_tpu_info().vmem_capacity_bytes
    except Exception:
        cap = None
    if cap is not None and cap >= (100 << 20):
        # v5e / v6e class: 128 MiB physical VMEM per TensorCore.
        return 64 << 20, 100 << 20
    # v7x (64 MiB per TC) or unknown chip: stay conservative so nothing spills.
    return 28 << 20, 48 << 20


def _patch_embed_kernel(x_ref, gamma_ref, beta_ref, o_ref):
    # x_ref:     (D, tile_l)   VMEM tile (channel-major)
    # gamma_ref: (1, D)        f32
    # beta_ref:  (1, D)        f32
    # o_ref:     (tile_l, D)   token-major output tile
    x32 = x_ref[...].astype(jnp.float32)            # (D, tile_l)

    # LayerNorm statistics over embed_dim == axis 0 of the channel-major tile:
    # mostly cross-vreg VPU adds (no full-tile cross-lane XLU reductions).
    mean = jnp.mean(x32, axis=0, keepdims=True)     # (1, tile_l)
    xc = x32 - mean
    var = jnp.mean(xc * xc, axis=0, keepdims=True)  # biased variance
    inv = jax.lax.rsqrt(var + EPS)
    xn = xc * inv                                   # (D, tile_l) normalized

    # Single transpose to token-major, then the affine part as a sublane
    # broadcast of the (1, D) params.
    o_ref[...] = (xn.T * gamma_ref[...] + beta_ref[...]).astype(o_ref.dtype)


def _choose_tile_l(B, L, D, in_bytes, out_bytes, budget_bytes):
    """Largest tile_l dividing L that fits the VMEM budget.

    Per grid step we hold: double-buffered input (2*D*tile_l*in_bytes),
    double-buffered output (2*tile_l*D*out_bytes) and ~3 full-tile f32
    temporaries (x32, xc, transposed result) -> ~12 extra bytes/elem.
    Prefers tile sizes whose total grid-step count B*(L//tile_l) is even so
    the grid splits evenly across the two v7x TensorCores.
    """
    per_elem = 2 * in_bytes + 2 * out_bytes + 12
    cap = max(128, budget_bytes // (per_elem * D))
    if L <= cap:
        return L  # whole row per step; full-dim block needs no 128 alignment

    # Candidate tile sizes: divisors of L that are multiples of 128 (lane
    # aligned input last dim) and fit the budget, largest first.
    cands = []
    t = (min(cap, L) // 128) * 128
    while t >= 128:
        if L % t == 0:
            cands.append(t)
        t -= 128
    if not cands:
        # TODO(synk): L with no 128-multiple divisor below the VMEM cap needs a
        # ragged-last-tile path (pl.cdiv grid + masked writeback); refuse
        # rather than silently exceeding vmem_limit_bytes.
        raise ValueError(
            f"H*W={L} has no 128-aligned divisor <= VMEM cap ({cap}); "
            "pass an explicit tile_l or pad the spatial dims."
        )
    for c in cands:
        if (B * (L // c)) % 2 == 0:
            return c
    return cands[0]


def patch_embed_forward(x_nchw, gamma, beta, *, tile_l=None):
    """x_nchw: (B, C, H, W) with C == embed_dim. Returns (B, H*W, embed_dim)."""
    B, D, H, W = x_nchw.shape
    L = H * W
    out_dtype = x_nchw.dtype

    budget_bytes, vmem_limit_bytes = _vmem_budgets()

    if tile_l is None:
        tile_l = _choose_tile_l(
            B, L, D,
            jnp.dtype(x_nchw.dtype).itemsize,
            jnp.dtype(out_dtype).itemsize,
            budget_bytes,
        )
    assert L % tile_l == 0, "tile_l must divide H*W"
    assert tile_l == L or tile_l % 128 == 0, (
        "tile_l must be H*W or a multiple of 128 (lane-aligned input last dim)"
    )

    x = x_nchw.reshape(B, D, L)                     # flatten(2): no data movement
    g = gamma.reshape(1, D).astype(jnp.float32)     # pre-cast params once
    b = beta.reshape(1, D).astype(jnp.float32)

    grid = (B, L // tile_l)
    # Note: if the budget forces tile_l down to ~256-512 on v7x, an input
    # pipeline_mode=pl.Buffered(3) is worth sweeping; kept at the default
    # double-buffering here since auto-sizing keeps tiles large.
    return pl.pallas_call(
        _patch_embed_kernel,
        out_shape=jax.ShapeDtypeStruct((B, L, D), out_dtype),
        grid_spec=pltpu.PrefetchScalarGridSpec(
            num_scalar_prefetch=0,
            grid=grid,
            in_specs=[
                # Leading batch dim squeezed out of the kernel refs.
                pl.BlockSpec((None, D, tile_l), lambda bi, li: (bi, 0, li)),
                pl.BlockSpec((1, D), lambda bi, li: (0, 0)),
                pl.BlockSpec((1, D), lambda bi, li: (0, 0)),
            ],
            out_specs=pl.BlockSpec((None, tile_l, D), lambda bi, li: (bi, li, 0)),
        ),
        compiler_params=pltpu.CompilerParams(
            dimension_semantics=("parallel", "parallel"),
            vmem_limit_bytes=vmem_limit_bytes,
        ),
    )(x, g, b)


def _reference(x_nchw, gamma, beta):
    B, D, H, W = x_nchw.shape
    xt = jnp.transpose(x_nchw.reshape(B, D, H * W), (0, 2, 1)).astype(jnp.float32)
    mean = jnp.mean(xt, axis=-1, keepdims=True)
    var = jnp.mean((xt - mean) ** 2, axis=-1, keepdims=True)
    y = (xt - mean) * jax.lax.rsqrt(var + EPS) * gamma + beta
    return y.astype(x_nchw.dtype)


if __name__ == "__main__":
    # Small shapes consistent with the module: the forward implies the channel
    # dim of the input already equals embed_dim.
    B, embed_dim, H, W = 2, 32, 16, 16

    key = jax.random.PRNGKey(0)
    kx, kg, kb = jax.random.split(key, 3)
    x = jax.random.normal(kx, (B, embed_dim, H, W), dtype=jnp.float32)
    # PyTorch default LayerNorm init is weight=1, bias=0; perturb slightly so
    # the affine path is exercised.
    gamma = 1.0 + 0.01 * jax.random.normal(kg, (embed_dim,), dtype=jnp.float32)
    beta = 0.01 * jax.random.normal(kb, (embed_dim,), dtype=jnp.float32)

    out = patch_embed_forward(x, gamma, beta)
    out = jax.block_until_ready(out)

    ref = _reference(x, gamma, beta)
    assert out.shape == (B, H * W, embed_dim)
    assert jnp.allclose(out, ref, atol=1e-5, rtol=1e-5)

    print("KERNEL_OK")
</pallas_src>

<mosaic_0001>
module attributes {stable_mosaic.version = 11 : i64} {
  func.func @_patch_embed_kernel(%arg0: i32, %arg1: i32, %arg2: memref<1x32x256xf32, #tpu.memory_space<vmem>>, %arg3: memref<1x32xf32, #tpu.memory_space<vmem>>, %arg4: memref<1x32xf32, #tpu.memory_space<vmem>>, %arg5: memref<1x256x32xf32, #tpu.memory_space<vmem>>) attributes {dimension_semantics = [#tpu.dimension_semantics<parallel>, #tpu.dimension_semantics<parallel>], iteration_bounds = array<i64: 2, 1>, scalar_prefetch = 0 : i64, scratch_operands = 0 : i64, tpu.core_type = #tpu.core_type<tc>, window_params = [{transform_indices = @transform_0, window_bounds = array<i64: 1, 32, 256>}, {pipeline_mode = #tpu.pipeline_mode<synchronous>, transform_indices = @transform_1, window_bounds = array<i64: 1, 32>}, {pipeline_mode = #tpu.pipeline_mode<synchronous>, transform_indices = @transform_2, window_bounds = array<i64: 1, 32>}, {transform_indices = @transform_3, window_bounds = array<i64: 1, 256, 32>}]} {
    %c0 = arith.constant 0 : index
    %c0_0 = arith.constant 0 : index
    %c0_1 = arith.constant 0 : index
    %0 = vector.load %arg2[%c0, %c0_0, %c0_1] : memref<1x32x256xf32, #tpu.memory_space<vmem>>, vector<1x32x256xf32>
    %1 = vector.shape_cast %0 : vector<1x32x256xf32> to vector<32x256xf32>
    %cst = arith.constant dense<0.000000e+00> : vector<256xf32>
    %2 = vector.multi_reduction <add>, %1, %cst [0] : vector<32x256xf32> to vector<256xf32>
    %3 = vector.shape_cast %2 : vector<256xf32> to vector<1x256xf32>
    %cst_2 = arith.constant 3.200000e+01 : f32
    %4 = vector.broadcast %cst_2 : f32 to vector<1x256xf32>
    %5 = arith.divf %3, %4 : vector<1x256xf32>
    %6 = vector.broadcast %5 : vector<1x256xf32> to vector<32x256xf32>
    %7 = arith.subf %1, %6 : vector<32x256xf32>
    %8 = arith.mulf %7, %7 : vector<32x256xf32>
    %cst_3 = arith.constant dense<0.000000e+00> : vector<256xf32>
    %9 = vector.multi_reduction <add>, %8, %cst_3 [0] : vector<32x256xf32> to vector<256xf32>
    %10 = vector.shape_cast %9 : vector<256xf32> to vector<1x256xf32>
    %cst_4 = arith.constant 3.200000e+01 : f32
    %11 = vector.broadcast %cst_4 : f32 to vector<1x256xf32>
    %12 = arith.divf %10, %11 : vector<1x256xf32>
    %cst_5 = arith.constant 9.99999974E-6 : f32
    %13 = vector.broadcast %cst_5 : f32 to vector<1x256xf32>
    %14 = arith.addf %12, %13 : vector<1x256xf32>
    %15 = math.rsqrt %14 : vector<1x256xf32>
    %16 = vector.broadcast %15 : vector<1x256xf32> to vector<32x256xf32>
    %17 = arith.mulf %7, %16 : vector<32x256xf32>
    %18 = tpu.transpose %17, [1, 0] : vector<32x256xf32> -> vector<256x32xf32>
    %c0_6 = arith.constant 0 : index
    %c0_7 = arith.constant 0 : index
    %19 = vector.load %arg3[%c0_6, %c0_7] : memref<1x32xf32, #tpu.memory_space<vmem>>, vector<1x32xf32>
    %20 = vector.broadcast %19 : vector<1x32xf32> to vector<256x32xf32>
    %21 = arith.mulf %18, %20 : vector<256x32xf32>
    %c0_8 = arith.constant 0 : index
    %c0_9 = arith.constant 0 : index
    %22 = vector.load %arg4[%c0_8, %c0_9] : memref<1x32xf32, #tpu.memory_space<vmem>>, vector<1x32xf32>
    %23 = vector.broadcast %22 : vector<1x32xf32> to vector<256x32xf32>
    %24 = arith.addf %21, %23 : vector<256x32xf32>
    %c0_10 = arith.constant 0 : index
    %c0_11 = arith.constant 0 : index
    %c0_12 = arith.constant 0 : index
    %25 = vector.load %arg5[%c0_10, %c0_11, %c0_12] : memref<1x256x32xf32, #tpu.memory_space<vmem>>, vector<1x256x32xf32>
    %26 = vector.shape_cast %25 : vector<1x256x32xf32> to vector<256x32xf32>
    %27 = vector.shape_cast %24 : vector<256x32xf32> to vector<1x256x32xf32>
    tpu.vector_store %arg5[%c0_10, %c0_11, %c0_12], %27 {strides = array<i32>} : memref<1x256x32xf32, #tpu.memory_space<vmem>>, vector<1x256x32xf32>,
    return
  }
  func.func @transform_0(%arg0: i32, %arg1: i32) -> (i32, i32, i32) {
    %c0_i32 = arith.constant 0 : i32
    %c0_i32_0 = arith.constant 0 : i32
    return %arg0, %c0_i32, %arg1 : i32, i32, i32
  }
  func.func @transform_1(%arg0: i32, %arg1: i32) -> (i32, i32) {
    %c0_i32 = arith.constant 0 : i32
    %c0_i32_0 = arith.constant 0 : i32
    %c0_i32_1 = arith.constant 0 : i32
    return %c0_i32, %c0_i32_0 : i32, i32
  }
  func.func @transform_2(%arg0: i32, %arg1: i32) -> (i32, i32) {
    %c0_i32 = arith.constant 0 : i32
    %c0_i32_0 = arith.constant 0 : i32
    %c0_i32_1 = arith.constant 0 : i32
    return %c0_i32, %c0_i32_0 : i32, i32
  }
  func.func @transform_3(%arg0: i32, %arg1: i32) -> (i32, i32, i32) {
    %c0_i32 = arith.constant 0 : i32
    %c0_i32_0 = arith.constant 0 : i32
    return %arg0, %arg1, %c0_i32 : i32, i32, i32
  }
}

</mosaic_0001>

<llo_original>
// kernel: tpu_custom_call.1
$region0: #{tpu_custom_call.1}
  #allocation0 [shape = 'u32[]', space=smem, size = 0x4, offset = 0x4, fixed_abs, tag = 'smem constant byte address 0x4 - core index']
  #allocation1 [shape = 'u32[72,128]{1,0:T(1,128)}', space=vmem, size = 0x9000, scoped, tag = 'internal scratch']
  %s0 = inlined_call_operand.hbm [shape: f32[2,32,256], index: 0, kind: input, shape index: {}]
  %s1 = inlined_call_operand.hbm [shape: f32[1,32], index: 1, kind: input, shape index: {}]
  %s2 = inlined_call_operand.vmem [shape: f32[1,32], index: 2, kind: input, shape index: {}]
  %s3 = inlined_call_operand.vmem [shape: f32[2,256,32], index: 3, kind: output, shape index: {}]
  %s4 = sld [smem:[#allocation0]]
  $region53: #{tpu_custom_call.1} parent=0
    _
  %s6 = ssub.s32 1, %s4
  %s7 = scalar_select 0, %s6, %s4
  $region1: #{tpu_custom_call.1} parent=0
    #allocation2 [shape = 'u8[65536]{0}', space=vmem, size = 0x10000, scoped, tag = 'input window, operand 0']
    #allocation3 [shape = 's32[2]{0}', space=sflag, size = 0x8, scoped, tag = 'scoped memory for tpu_custom_call.1']
    #allocation4 [shape = 'u8[512]{0}', space=vmem, size = 0x400, scoped, tag = 'input window, operand 1, single buffered']
    #allocation5 [shape = 's32[1]{0}', space=sflag, size = 0x4, scoped, tag = 'scoped memory for tpu_custom_call.1']
    %8 = vsyncpa [#allocation3], 0
    %s9 = scalar_lea.sflag [#allocation3], 1
    %10 = vsyncpa %s9, 0
    %11 = vsyncpa [#allocation5], 0
    loop: start=0, step=1, limit=4
    $region2: #{tpu_custom_call.1} parent=1 // loop_pre_header
      _
    $region3: #{tpu_custom_call.1} parent=1 // loop_header
      %s13 = sphi 0, %s17
      %p14 = scmp.ge.s32.totalorder %s13, 4
      %s20 = sphi 0, %s32
      %s21 = sphi 0, %s28
      %s22 = sphi 0, %s20
      %s23 = sphi 0, %s21
      %s24 = sphi 0, %s22
      %s25 = sphi 0, %s23
      %s37 = sphi 0, %s39
      %s40 = sphi 0, %s37
      %s41 = sphi 0, %s40
      %s57 = sphi 0, %s41
      %s61 = sphi 0, %s61
      %s63 = sphi 0, %s61
      %s64 = sphi 0, %s63
      %s78 = sphi 0, %s64
      %s82 = sphi 0, %s82
      %s84 = sphi 0, %s82
      %s85 = sphi 0, %s84
      %s99 = sphi 0, %s85
      %s107 = sphi 0, %s109
      %s110 = sphi 0, %s107
      %s111 = sphi 0, %s110
      %s127 = sphi 0, %s111
    $region4: #{tpu_custom_call.1} parent=1 // loop_header_branch
      %16 = sbr.rel (%p14) target = $region8
    $region5: #{tpu_custom_call.1} parent=1 // loop_body
      %s18 = ssub.s32 %s13, 1
      %s19 = ssub.s32 %s13, 2
      %s26 = sadd.s32 1, %s21
      %p27 = scmp.ge.s32.totalorder %s26, 1
      %s28 = scalar_select %p27, 0, %s26
      %s29 = sadd.s32 1, %s20
      %s30 = scalar_select %p27, %s29, %s20
      %p31 = scmp.ge.s32.totalorder %s30, 2
      %s32 = scalar_select %p31, 0, %s30
      %s33 = ssub.s32 %s20, %s32
      %s34 = ssub.s32 %s21, %s28
      %s35 = sor.u32 %s33, %s34
      %p36 = scmp.eq.s32.totalorder %s35, 0
      %s38 = sadd.s32 %s37, 1
      %s39 = scalar_select %p36, %s37, %s38
      %p42 = pneg %p36
      %p43 = scmp.eq.s32.totalorder %s13, 1
      %p44 = por %p42, %p43
      %p45 = scmp.ne.s32.totalorder %s37, %s40
      %p46 = scmp.eq.s32.totalorder %s13, 0
      %p47 = por %p45, %p46
      %p48 = scmp.ne.s32.totalorder %s37, %s40
      %p49 = scmp.eq.s32.totalorder %s18, 1
      %p50 = por %p48, %p49
      %p51 = scmp.ne.s32.totalorder %s40, %s41
      %p52 = scmp.eq.s32.totalorder %s18, 0
      %p53 = por %p51, %p52
      %p54 = scmp.ne.s32.totalorder %s40, %s41
      %p55 = scmp.eq.s32.totalorder %s19, 1
      %p56 = por %p54, %p55
      %p58 = scmp.ne.s32.totalorder %s41, %s57
      %p59 = scmp.eq.s32.totalorder %s19, 0
      %p60 = por %p58, %p59
      %s62 = sadd.s32 %s61, 1
      %p65 = scmp.eq.s32.totalorder %s13, 1
      %p66 = scmp.ne.s32.totalorder %s61, %s63
      %p67 = scmp.eq.s32.totalorder %s13, 0
      %p68 = por %p66, %p67
      %p69 = scmp.ne.s32.totalorder %s61, %s63
      %p70 = scmp.eq.s32.totalorder %s18, 1
      %p71 = por %p69, %p70
      %p72 = scmp.ne.s32.totalorder %s63, %s64
      %p73 = scmp.eq.s32.totalorder %s18, 0
      %p74 = por %p72, %p73
      %p75 = scmp.ne.s32.totalorder %s63, %s64
      %p76 = scmp.eq.s32.totalorder %s19, 1
      %p77 = por %p75, %p76
      %p79 = scmp.ne.s32.totalorder %s64, %s78
      %p80 = scmp.eq.s32.totalorder %s19, 0
      %p81 = por %p79, %p80
      %s83 = sadd.s32 %s82, 1
      %p86 = scmp.eq.s32.totalorder %s13, 1
      %p87 = scmp.ne.s32.totalorder %s82, %s84
      %p88 = scmp.eq.s32.totalorder %s13, 0
      %p89 = por %p87, %p88
      %p90 = scmp.ne.s32.totalorder %s82, %s84
      %p91 = scmp.eq.s32.totalorder %s18, 1
      %p92 = por %p90, %p91
      %p93 = scmp.ne.s32.totalorder %s84, %s85
      %p94 = scmp.eq.s32.totalorder %s18, 0
      %p95 = por %p93, %p94
      %p96 = scmp.ne.s32.totalorder %s84, %s85
      %p97 = scmp.eq.s32.totalorder %s19, 1
      %p98 = por %p96, %p97
      %p100 = scmp.ne.s32.totalorder %s85, %s99
      %p101 = scmp.eq.s32.totalorder %s19, 0
      %p102 = por %p100, %p101
      %s103 = ssub.s32 %s20, %s32
      %s104 = ssub.s32 %s21, %s28
      %s105 = sor.u32 %s103, %s104
      %p106 = scmp.eq.s32.totalorder %s105, 0
      %s108 = sadd.s32 %s107, 1
      %s109 = scalar_select %p106, %s107, %s108
      %p112 = pneg %p106
      %p113 = scmp.eq.s32.totalorder %s13, 1
      %p114 = por %p112, %p113
      %p115 = scmp.ne.s32.totalorder %s107, %s110
      %p116 = scmp.eq.s32.totalorder %s13, 0
      %p117 = por %p115, %p116
      %p118 = scmp.ne.s32.totalorder %s107, %s110
      %p119 = scmp.eq.s32.totalorder %s18, 1
      %p120 = por %p118, %p119
      %p121 = scmp.ne.s32.totalorder %s110, %s111
      %p122 = scmp.eq.s32.totalorder %s18, 0
      %p123 = por %p121, %p122
      %p124 = scmp.ne.s32.totalorder %s110, %s111
      %p125 = scmp.eq.s32.totalorder %s19, 1
      %p126 = por %p124, %p125
      %p128 = scmp.ne.s32.totalorder %s111, %s127
      %p129 = scmp.eq.s32.totalorder %s19, 0
      %p130 = por %p128, %p129
      %p131 = scmp.le.s32.totalorder 1, %s13
      %p132 = scmp.lt.s32.totalorder %s13, 3
      %p133 = pnand %p131, %p132
      %p134 = pneg %p133
      // Predicated region
      $region9: #{tpu_custom_call.1} parent=5 // pred_check
        _
      $region10: #{tpu_custom_call.1} parent=5 // pred_check_branch
        %136 = sbr.rel (%p133) target = $region12
      $region11: #{tpu_custom_call.1} parent=5 // pred_region
        %s137 = ssub.s32 %s13, 1
        // Predicated region
        $region13: #{tpu_custom_call.1} parent=11 // pred_check
          %p138 = pneg %p74
        $region14: #{tpu_custom_call.1} parent=11 // pred_check_branch
          %140 = sbr.rel (%p138) target = $region16
        $region15: #{tpu_custom_call.1} parent=11 // pred_region
          %142 = vsyncadd [#allocation5], 0
          %s144 = sshll.u32 %s1, 4
          %s145 = int_to_ptr.hbm [resolvable:$true] %s144
          %s146 = sshll.u32 [#allocation4], 4
          %s147 = int_to_ptr.vmem [resolvable:$true] %s146
          %149 = dma.hbm_to_vmem [thread:$0]  %s145, 16, %s147, [#allocation5]
        $region16: #{tpu_custom_call.1} parent=11 // pred_fallthru
          _
        // Predicated region
        $region17: #{tpu_custom_call.1} parent=11 // pred_check
          %p150 = pneg %p95
        $region18: #{tpu_custom_call.1} parent=11 // pred_check_branch
          %152 = sbr.rel (%p150) target = $region20
        $region19: #{tpu_custom_call.1} parent=11 // pred_region
          _
        $region20: #{tpu_custom_call.1} parent=11 // pred_fallthru
          _
      $region12: #{tpu_custom_call.1} parent=5 // pred_fallthru
        _
      %p153 = scmp.lt.s32.totalorder %s13, 2
      // Predicated region
      $region21: #{tpu_custom_call.1} parent=5 // pred_check
        %p154 = pneg %p153
      $region22: #{tpu_custom_call.1} parent=5 // pred_check_branch
        %156 = sbr.rel (%p154) target = $region24
      $region23: #{tpu_custom_call.1} parent=5 // pred_region
        // Predicated region
        $region25: #{tpu_custom_call.1} parent=23 // pred_check
          %p157 = pneg %p47
        $region26: #{tpu_custom_call.1} parent=23 // pred_check_branch
          %159 = sbr.rel (%p157) target = $region28
        $region27: #{tpu_custom_call.1} parent=23 // pred_region
          %s160 = sand.u32 %s37, 1
          %s161 = scalar_lea.sflag [#allocation3], %s160
          %s162 = sand.u32 %s37, 1
          %s163 = smul.addr %s162, 64
          %s164 = scalar_lea.vmem [#allocation2], %s163
          %s165 = smul.u32 2, %s21
          %167 = vsyncadd %s161, 0
          %s168 = smul.addr %s20, 8
          %s169 = sadd.s32 %s165, %s168
          %s170 = smul.addr %s169, 8
          %s171 = scalar_lea.hbm %s0, %s170
          %s172 = sshll.u32 %s171, 4
          %s173 = int_to_ptr.hbm [resolvable:$true] %s172
          %s174 = sshll.u32 %s164, 4
          %s175 = int_to_ptr.vmem [resolvable:$true] %s174
          %180 = dma.hbm_to_vmem [thread:$0]  %s173, 1024, %s175, %s161, 256, 256, 16
        $region28: #{tpu_custom_call.1} parent=23 // pred_fallthru
          _
      $region24: #{tpu_custom_call.1} parent=5 // pred_fallthru
        _
      %p181 = scmp.le.s32.totalorder 1, %s13
      %p182 = scmp.lt.s32.totalorder %s13, 3
      %p183 = pnand %p181, %p182
      %p184 = pneg %p183
      // Predicated region
      $region29: #{tpu_custom_call.1} parent=5 // pred_check
        _
      $region30: #{tpu_custom_call.1} parent=5 // pred_check_branch
        %186 = sbr.rel (%p183) target = $region32
      $region31: #{tpu_custom_call.1} parent=5 // pred_region
        %s187 = ssub.s32 %s13, 1
        %s188 = sand.u32 %s40, 1
        %s189 = scalar_lea.sflag [#allocation3], %s188
        %s190 = sand.u32 %s40, 1
        %s191 = smul.addr %s190, 64
        %s192 = scalar_lea.vmem [#allocation2], %s191
        // Predicated region
        $region33: #{tpu_custom_call.1} parent=31 // pred_check
          %p193 = pneg %p53
        $region34: #{tpu_custom_call.1} parent=31 // pred_check_branch
          %195 = sbr.rel (%p193) target = $region36
        $region35: #{tpu_custom_call.1} parent=31 // pred_region
          %197 = dma.done %s189, 1024
        $region36: #{tpu_custom_call.1} parent=31 // pred_fallthru
          _
        // Predicated region
        $region37: #{tpu_custom_call.1} parent=31 // pred_check
          %p198 = pneg %p74
        $region38: #{tpu_custom_call.1} parent=31 // pred_check_branch
          %200 = sbr.rel (%p198) target = $region40
        $region39: #{tpu_custom_call.1} parent=31 // pred_region
          %202 = dma.done [#allocation5], 16
        $region40: #{tpu_custom_call.1} parent=31 // pred_fallthru
          _
        %s203 = sand.u32 %s40, 1
        %s204 = scalar_lea.sflag [#allocation3], %s203
        %s205 = sand.u32 %s40, 1
        %s206 = smul.addr %s205, 64
        %s207 = scalar_lea.vmem [#allocation2], %s206
        %p208 = pneg %p53
        %p209 = pneg %p50
        %p210 = pneg %p74
        %p211 = pneg %p71
        %p212 = pneg %p95
        %p213 = pneg %p92
        %p214 = pneg %p123
        %p215 = pneg %p120
        %s216 = smul.u32 32, %s23
        %p217 = scmp.lt.s32.totalorder %s22, 1
        %s218 = scalar_select %p217, %s22, 1
        %p219 = scmp.lt.s32.totalorder %s216, 31
        %s220 = scalar_select %p219, %s216, 31
        %s221 = smul.addr %s218, 32
        %s222 = sadd.s32 %s220, %s221
        %s223 = smul.addr %s222, 8
        %s224 = scalar_lea.vmem %s3, %s223
        %s225 = smul.u32 2, %s23
        %s226 = smul.u32 32, %s23
        %p227 = scmp.lt.s32.totalorder %s22, 1
        %s228 = scalar_select %p227, %s22, 1
        %p229 = scmp.lt.s32.totalorder %s226, 31
        %s230 = scalar_select %p229, %s226, 31
        %s231 = smul.addr %s228, 32
        %s232 = sadd.s32 %s230, %s231
        %s233 = smul.addr %s232, 8
        %s234 = scalar_lea.vmem %s3, %s233
        %s235 = smul.u32 32, %s23
        %v236 = vld [vmem:[%s192] sm:$0xff]
        %v237 = vld [vmem:[%s192 + $0x8] sm:$0xff]
        %v238 = vld [vmem:[%s192 + $0x10] sm:$0xff]
        %v239 = vld [vmem:[%s192 + $0x18] sm:$0xff]
        %v240 = vld [vmem:[%s192 + $0x20] sm:$0xff]
        %v241 = vld [vmem:[%s192 + $0x28] sm:$0xff]
        %v242 = vld [vmem:[%s192 + $0x30] sm:$0xff]
        %v243 = vld [vmem:[%s192 + $0x38] sm:$0xff]
        %v244 = vadd.f32 %v236, %v238
        %v245 = vadd.f32 %v244, %v240
        %v246 = vadd.f32 %v245, %v242
        %v247 = vrot.slane %v246, 4
        %v248 = vadd.f32 %v246, %v247
        %v249 = vrot.slane %v248, 2
        %v250 = vadd.f32 %v248, %v249
        %v251 = vrot.slane %v250, 1
        %v252 = vadd.f32 %v250, %v251
        %v253 = vadd.f32 %v237, %v239
        %v254 = vadd.f32 %v253, %v241
        %v255 = vadd.f32 %v254, %v243
        %v256 = vrot.slane %v255, 4
        %v257 = vadd.f32 %v255, %v256
        %v258 = vrot.slane %v257, 2
        %v259 = vadd.f32 %v257, %v258
        %v260 = vrot.slane %v259, 1
        %v261 = vadd.f32 %v259, %v260
        %v262 = vrcp.pop 32.0
        %v263 = vmul.f32 32.0, %v262
        %v264 = vsub.f32 1.0, %v263
        %v265 = vmul.f32 %v262, %v264
        %v266 = vadd.f32 %v262, %v265
        %vm267 = vweird.f32 %v262
        %v268 = vsel %vm267, %v262, %v266
        %v269 = vmul.f32 %v252, %v268
        %v270 = vmul.f32 %v261, %v268
        %v271 = vsub.f32 %v236, %v269
        %v272 = vsub.f32 %v237, %v270
        %v273 = vsub.f32 %v238, %v269
        %v274 = vsub.f32 %v239, %v270
        %v275 = vsub.f32 %v240, %v269
        %v276 = vsub.f32 %v241, %v270
        %v277 = vsub.f32 %v242, %v269
        %v278 = vsub.f32 %v243, %v270
        %v279 = vmul.f32 %v271, %v271
        %v280 = vmul.f32 %v272, %v272
        %v281 = vmul.f32 %v273, %v273
        %v282 = vmul.f32 %v274, %v274
        %v283 = vmul.f32 %v275, %v275
        %v284 = vmul.f32 %v276, %v276
        %v285 = vmul.f32 %v277, %v277
        %v286 = vmul.f32 %v278, %v278
        %v287 = vadd.f32 %v279, %v281
        %v288 = vadd.f32 %v287, %v283
        %v289 = vadd.f32 %v288, %v285
        %v290 = vrot.slane %v289, 4
        %v291 = vadd.f32 %v289, %v290
        %v292 = vrot.slane %v291, 2
        %v293 = vadd.f32 %v291, %v292
        %v294 = vrot.slane %v293, 1
        %v295 = vadd.f32 %v293, %v294
        %v296 = vadd.f32 %v280, %v282
        %v297 = vadd.f32 %v296, %v284
        %v298 = vadd.f32 %v297, %v286
        %v299 = vrot.slane %v298, 4
        %v300 = vadd.f32 %v298, %v299
        %v301 = vrot.slane %v300, 2
        %v302 = vadd.f32 %v300, %v301
        %v303 = vrot.slane %v302, 1
        %v304 = vadd.f32 %v302, %v303
        %v305 = vmul.f32 %v295, %v268
        %v306 = vmul.f32 %v304, %v268
        %v307 = vadd.f32 %v305, 1e-05
        %v308 = vadd.f32 %v306, 1e-05
        %v309 = vrsqrt.pop %v307
        %v310 = vmul.f32 %v309, %v307
        %v311 = vmul.f32 %v310, %v309
        %v312 = vmul.f32 0.5, %v311
        %v313 = vsub.f32 1.5, %v312
        %v314 = vmul.f32 %v309, %v313
        %vm315 = vweird.f32 %v307
        %vm316 = vweird.f32 %v309
        %vm317 = vmor %vm315, %vm316
        %v318 = vsel %vm317, %v309, %v314
        %v319 = vrsqrt.pop %v308
        %v320 = vmul.f32 %v319, %v308
        %v321 = vmul.f32 %v320, %v319
        %v322 = vmul.f32 0.5, %v321
        %v323 = vsub.f32 1.5, %v322
        %v324 = vmul.f32 %v319, %v323
        %vm325 = vweird.f32 %v308
        %vm326 = vweird.f32 %v319
        %vm327 = vmor %vm325, %vm326
        %v328 = vsel %vm327, %v319, %v324
        %v329 = vmul.f32 %v271, %v318
        %v330 = vmul.f32 %v272, %v328
        %v331 = vmul.f32 %v273, %v318
        %v332 = vmul.f32 %v274, %v328
        %v333 = vmul.f32 %v275, %v318
        %v334 = vmul.f32 %v276, %v328
        %v335 = vmul.f32 %v277, %v318
        %v336 = vmul.f32 %v278, %v328
        %337 = vxpose.xlu0.b32.start [1/16] %v329, 128
        %338 = vxpose.xlu0.b32.cont [2/16] %v331, 128
        %339 = vxpose.xlu0.b32.cont [3/16] %v333, 128
        %340 = vxpose.xlu0.b32.cont [4/16] %v335, 128
        %341 = vxpose.xlu0.b32.cont [5/16] 0.0, 128
        %342 = vxpose.xlu0.b32.cont [6/16] 0.0, 128
        %343 = vxpose.xlu0.b32.cont [7/16] 0.0, 128
        %344 = vxpose.xlu0.b32.cont [8/16] 0.0, 128
        %345 = vxpose.xlu0.b32.cont [9/16] 0.0, 128
        %346 = vxpose.xlu0.b32.cont [10/16] 0.0, 128
        %347 = vxpose.xlu0.b32.cont [11/16] 0.0, 128
        %348 = vxpose.xlu0.b32.cont [12/16] 0.0, 128
        %349 = vxpose.xlu0.b32.cont [13/16] 0.0, 128
        %350 = vxpose.xlu0.b32.cont [14/16] 0.0, 128
        %351 = vxpose.xlu0.b32.cont [15/16] 0.0, 128
        %352 = vxpose.xlu0.b32.end [16/16] 0.0, 128
        %v353 = vpop.trf.xlu0
        %v354 = vpop.trf.xlu0
        %v355 = vpop.trf.xlu0
        %v356 = vpop.trf.xlu0
        %v357 = vpop.trf.xlu0
        %v358 = vpop.trf.xlu0
        %v359 = vpop.trf.xlu0
        %v360 = vpop.trf.xlu0
        %v361 = vpop.trf.xlu0
        %v362 = vpop.trf.xlu0
        %v363 = vpop.trf.xlu0
        %v364 = vpop.trf.xlu0
        %v365 = vpop.trf.xlu0
        %v366 = vpop.trf.xlu0
        %v367 = vpop.trf.xlu0
        %v368 = vpop.trf.xlu0
        %369 = vxpose.xlu0.b32.start [1/16] %v330, 128
        %370 = vxpose.xlu0.b32.cont [2/16] %v332, 128
        %371 = vxpose.xlu0.b32.cont [3/16] %v334, 128
        %372 = vxpose.xlu0.b32.cont [4/16] %v336, 128
        %373 = vxpose.xlu0.b32.cont [5/16] 0.0, 128
        %374 = vxpose.xlu0.b32.cont [6/16] 0.0, 128
        %375 = vxpose.xlu0.b32.cont [7/16] 0.0, 128
        %376 = vxpose.xlu0.b32.cont [8/16] 0.0, 128
        %377 = vxpose.xlu0.b32.cont [9/16] 0.0, 128
        %378 = vxpose.xlu0.b32.cont [10/16] 0.0, 128
        %379 = vxpose.xlu0.b32.cont [11/16] 0.0, 128
        %380 = vxpose.xlu0.b32.cont [12/16] 0.0, 128
        %381 = vxpose.xlu0.b32.cont [13/16] 0.0, 128
        %382 = vxpose.xlu0.b32.cont [14/16] 0.0, 128
        %383 = vxpose.xlu0.b32.cont [15/16] 0.0, 128
        %384 = vxpose.xlu0.b32.end [16/16] 0.0, 128
        %v385 = vpop.trf.xlu0
        %v386 = vpop.trf.xlu0
        %v387 = vpop.trf.xlu0
        %v388 = vpop.trf.xlu0
        %v389 = vpop.trf.xlu0
        %v390 = vpop.trf.xlu0
        %v391 = vpop.trf.xlu0
        %v392 = vpop.trf.xlu0
        %v393 = vpop.trf.xlu0
        %v394 = vpop.trf.xlu0
        %v395 = vpop.trf.xlu0
        %v396 = vpop.trf.xlu0
        %v397 = vpop.trf.xlu0
        %v398 = vpop.trf.xlu0
        %v399 = vpop.trf.xlu0
        %v400 = vpop.trf.xlu0
        %v401 = vld [vmem:[#allocation4] sm:$0x1]
        %v403 = vperm.slane %v401, 0
        %v405 = vmul.f32 %v353, %v403
        %v406 = vmul.f32 %v354, %v403
        %v407 = vmul.f32 %v355, %v403
        %v408 = vmul.f32 %v356, %v403
        %v409 = vmul.f32 %v357, %v403
        %v410 = vmul.f32 %v358, %v403
        %v411 = vmul.f32 %v359, %v403
        %v412 = vmul.f32 %v360, %v403
        %v413 = vmul.f32 %v361, %v403
        %v414 = vmul.f32 %v362, %v403
        %v415 = vmul.f32 %v363, %v403
        %v416 = vmul.f32 %v364, %v403
        %v417 = vmul.f32 %v365, %v403
        %v418 = vmul.f32 %v366, %v403
        %v419 = vmul.f32 %v367, %v403
        %v420 = vmul.f32 %v368, %v403
        %v421 = vmul.f32 %v385, %v403
        %v422 = vmul.f32 %v386, %v403
        %v423 = vmul.f32 %v387, %v403
        %v424 = vmul.f32 %v388, %v403
        %v425 = vmul.f32 %v389, %v403
        %v426 = vmul.f32 %v390, %v403
        %v427 = vmul.f32 %v391, %v403
        %v428 = vmul.f32 %v392, %v403
        %v429 = vmul.f32 %v393, %v403
        %v430 = vmul.f32 %v394, %v403
        %v431 = vmul.f32 %v395, %v403
        %v432 = vmul.f32 %v396, %v403
        %v433 = vmul.f32 %v397, %v403
        %v434 = vmul.f32 %v398, %v403
        %v435 = vmul.f32 %v399, %v403
        %v436 = vmul.f32 %v400, %v403
        %v437 = vld [vmem:[%s2] sm:$0x1]
        %v439 = vperm.slane %v437, 0
        %v441 = vadd.f32 %v405, %v439
        %v442 = vadd.f32 %v406, %v439
        %v443 = vadd.f32 %v407, %v439
        %v444 = vadd.f32 %v408, %v439
        %v445 = vadd.f32 %v409, %v439
        %v446 = vadd.f32 %v410, %v439
        %v447 = vadd.f32 %v411, %v439
        %v448 = vadd.f32 %v412, %v439
        %v449 = vadd.f32 %v413, %v439
        %v450 = vadd.f32 %v414, %v439
        %v451 = vadd.f32 %v415, %v439
        %v452 = vadd.f32 %v416, %v439
        %v453 = vadd.f32 %v417, %v439
        %v454 = vadd.f32 %v418, %v439
        %v455 = vadd.f32 %v419, %v439
        %v456 = vadd.f32 %v420, %v439
        %v457 = vadd.f32 %v421, %v439
        %v458 = vadd.f32 %v422, %v439
        %v459 = vadd.f32 %v423, %v439
        %v460 = vadd.f32 %v424, %v439
        %v461 = vadd.f32 %v425, %v439
        %v462 = vadd.f32 %v426, %v439
        %v463 = vadd.f32 %v427, %v439
        %v464 = vadd.f32 %v428, %v439
        %v465 = vadd.f32 %v429, %v439
        %v466 = vadd.f32 %v430, %v439
        %v467 = vadd.f32 %v431, %v439
        %v468 = vadd.f32 %v432, %v439
        %v469 = vadd.f32 %v433, %v439
        %v470 = vadd.f32 %v434, %v439
        %v471 = vadd.f32 %v435, %v439
        %v472 = vadd.f32 %v436, %v439
        %vm473 = vcmask 261120
        %474 = vst.msk [vmem:[%s234] sm:$0xff] %vm473, %v441
        %475 = vst.msk [vmem:[%s234 + $0x8] sm:$0xff] %vm473, %v442
        %476 = vst.msk [vmem:[%s234 + $0x10] sm:$0xff] %vm473, %v443
        %477 = vst.msk [vmem:[%s234 + $0x18] sm:$0xff] %vm473, %v444
        %478 = vst.msk [vmem:[%s234 + $0x20] sm:$0xff] %vm473, %v445
        %479 = vst.msk [vmem:[%s234 + $0x28] sm:$0xff] %vm473, %v446
        %480 = vst.msk [vmem:[%s234 + $0x30] sm:$0xff] %vm473, %v447
        %481 = vst.msk [vmem:[%s234 + $0x38] sm:$0xff] %vm473, %v448
        %482 = vst.msk [vmem:[%s234 + $0x40] sm:$0xff] %vm473, %v449
        %483 = vst.msk [vmem:[%s234 + $0x48] sm:$0xff] %vm473, %v450
        %484 = vst.msk [vmem:[%s234 + $0x50] sm:$0xff] %vm473, %v451
        %485 = vst.msk [vmem:[%s234 + $0x58] sm:$0xff] %vm473, %v452
        %486 = vst.msk [vmem:[%s234 + $0x60] sm:$0xff] %vm473, %v453
        %487 = vst.msk [vmem:[%s234 + $0x68] sm:$0xff] %vm473, %v454
        %488 = vst.msk [vmem:[%s234 + $0x70] sm:$0xff] %vm473, %v455
        %489 = vst.msk [vmem:[%s234 + $0x78] sm:$0xff] %vm473, %v456
        %490 = vst.msk [vmem:[%s234 + $0x80] sm:$0xff] %vm473, %v457
        %491 = vst.msk [vmem:[%s234 + $0x88] sm:$0xff] %vm473, %v458
        %492 = vst.msk [vmem:[%s234 + $0x90] sm:$0xff] %vm473, %v459
        %493 = vst.msk [vmem:[%s234 + $0x98] sm:$0xff] %vm473, %v460
        %494 = vst.msk [vmem:[%s234 + $0xa0] sm:$0xff] %vm473, %v461
        %495 = vst.msk [vmem:[%s234 + $0xa8] sm:$0xff] %vm473, %v462
        %496 = vst.msk [vmem:[%s234 + $0xb0] sm:$0xff] %vm473, %v463
        %497 = vst.msk [vmem:[%s234 + $0xb8] sm:$0xff] %vm473, %v464
        %498 = vst.msk [vmem:[%s234 + $0xc0] sm:$0xff] %vm473, %v465
        %499 = vst.msk [vmem:[%s234 + $0xc8] sm:$0xff] %vm473, %v466
        %500 = vst.msk [vmem:[%s234 + $0xd0] sm:$0xff] %vm473, %v467
        %501 = vst.msk [vmem:[%s234 + $0xd8] sm:$0xff] %vm473, %v468
        %502 = vst.msk [vmem:[%s234 + $0xe0] sm:$0xff] %vm473, %v469
        %503 = vst.msk [vmem:[%s234 + $0xe8] sm:$0xff] %vm473, %v470
        %504 = vst.msk [vmem:[%s234 + $0xf0] sm:$0xff] %vm473, %v471
        %505 = vst.msk [vmem:[%s234 + $0xf8] sm:$0xff] %vm473, %v472
        %s506 = smul.u32 32, %s23
        %p507 = scmp.lt.s32.totalorder %s22, 1
        %s508 = scalar_select %p507, %s22, 1
        %p509 = scmp.lt.s32.totalorder %s506, 31
        %s510 = scalar_select %p509, %s506, 31
        %s511 = smul.addr %s508, 32
        %s512 = sadd.s32 %s510, %s511
        %s513 = smul.addr %s512, 8
        %s514 = scalar_lea.vmem %s3, %s513
        // Predicated region
        $region41: #{tpu_custom_call.1} parent=31 // pred_check
          %p515 = pneg %p120
        $region42: #{tpu_custom_call.1} parent=31 // pred_check_branch
          %517 = sbr.rel (%p515) target = $region44
        $region43: #{tpu_custom_call.1} parent=31 // pred_region
          %s518 = smul.u32 32, %s23
        $region44: #{tpu_custom_call.1} parent=31 // pred_fallthru
          _
      $region32: #{tpu_custom_call.1} parent=5 // pred_fallthru
        _
      %p519 = scmp.le.s32.totalorder 2, %s13
      // Predicated region
      $region45: #{tpu_custom_call.1} parent=5 // pred_check
        %p520 = pneg %p519
      $region46: #{tpu_custom_call.1} parent=5 // pred_check_branch
        %522 = sbr.rel (%p520) target = $region48
      $region47: #{tpu_custom_call.1} parent=5 // pred_region
        %s523 = ssub.s32 %s13, 2
        // Predicated region
        $region49: #{tpu_custom_call.1} parent=47 // pred_check
          %p524 = pneg %p126
        $region50: #{tpu_custom_call.1} parent=47 // pred_check_branch
          %526 = sbr.rel (%p524) target = $region52
        $region51: #{tpu_custom_call.1} parent=47 // pred_region
          %s527 = smul.u32 32, %s25
          %p528 = scmp.lt.s32.totalorder %s24, 1
          %s529 = scalar_select %p528, %s24, 1
          %p530 = scmp.lt.s32.totalorder %s527, 31
          %s531 = scalar_select %p530, %s527, 31
          %s532 = smul.addr %s529, 32
          %s533 = sadd.s32 %s531, %s532
          %s534 = smul.addr %s533, 8
          %s535 = scalar_lea.vmem %s3, %s534
        $region52: #{tpu_custom_call.1} parent=47 // pred_fallthru
          _
      $region48: #{tpu_custom_call.1} parent=5 // pred_fallthru
        _
    $region6: #{tpu_custom_call.1} parent=1 // loop_footer
      %s17 = sadd.s32 1, %s13
    $region7: #{tpu_custom_call.1} parent=1 // loop_footer_branch
      %12 = sbr.rel target = $region3
    $region8: #{tpu_custom_call.1} parent=1 // loop_exit
      _
    %536 = vsyncpa [#allocation3], 1
    %s537 = scalar_lea.sflag [#allocation3], 1
    %538 = vsyncpa %s537, 1
    %539 = vsyncpa [#allocation5], 1

</llo_original>
